<compile_context>
chip_gen: v6e
topology: v6e:2x2x1
jax: 0.10.0
libtpu: 0.0.40
codegen_flags: <defaults>
</compile_context>

<pallas_src>
import jax
import jax.numpy as jnp
from jax.experimental import pallas as pl
from jax.experimental.pallas import tpu as pltpu

F = 15        # true feature width of the hidden layers
F_PAD = 16    # padded feature width (sublane-friendly)


def lr_net_kernel(x_ref, w1_ref, b1_ref, w2_ref, b2_ref, w3_ref, b3_ref, out_ref):
    x = x_ref[...]                                            # (1, T)  batch on lanes

    # Layer 1: Linear(1, 15) + ReLU.  K=1 contraction == rank-1 outer product,
    # so do it on the VPU (broadcast multiply), keeping the MXU off the path.
    h1 = jnp.maximum(w1_ref[...] * x + b1_ref[...], 0.0)      # (F_PAD, T)

    # Layer 2: Linear(15, 15) + ReLU on the MXU (16x16 @ 16xT), f32 accumulate.
    h2 = jnp.dot(w2_ref[...], h1, preferred_element_type=jnp.float32) + b2_ref[...]
    h2 = jnp.maximum(h2, 0.0)                                 # (F_PAD, T)

    # Layer 3: Linear(15, 1).  Output width 1 -> elementwise mul + sublane
    # reduction (XLU/VPU) instead of a degenerate MXU matmul.
    y = jnp.sum(w3_ref[...] * h2, axis=0, keepdims=True) + b3_ref[0, 0]   # (1, T)
    out_ref[...] = y.astype(out_ref.dtype)


def lr_net_forward(x, w1, b1, w2, b2, w3, b3, *, tile_n=512):
    """x: (N, 1) f32; weights in the (fan_in, fan_out) layout from init_params."""
    n = x.shape[0]
    n_pad = pl.cdiv(n, tile_n) * tile_n

    # Lane-dense input: batch on the last axis, zero-padded to a tile multiple.
    xt = jnp.pad(x[:, 0], (0, n_pad - n)).reshape(1, n_pad)

    # Kernel-side parameter layout: (out_features, in_features) column vectors /
    # matrix, zero-padded to F_PAD so padded rows stay exactly zero through ReLU.
    def pad_col(v):
        v = v.reshape(-1, 1).astype(jnp.float32)
        return jnp.pad(v, ((0, F_PAD - v.shape[0]), (0, 0)))

    w1_k = pad_col(w1)                       # (F_PAD, 1)
    b1_k = pad_col(b1)                       # (F_PAD, 1)
    w2_k = jnp.pad(w2.T.astype(jnp.float32),
                   ((0, F_PAD - F), (0, F_PAD - F)))          # (F_PAD, F_PAD)
    b2_k = pad_col(b2)                       # (F_PAD, 1)
    w3_k = pad_col(w3)                       # (F_PAD, 1)
    b3_k = b3.reshape(1, 1).astype(jnp.float32)               # scalar, via SMEM

    grid = (n_pad // tile_n,)

    def resident(shape):
        # Constant index_map -> block never changes -> weights stay in VMEM
        # across grid steps (no re-DMA).
        return pl.BlockSpec(shape, lambda i: (0, 0))

    yt = pl.pallas_call(
        lr_net_kernel,
        out_shape=jax.ShapeDtypeStruct((1, n_pad), jnp.float32),
        grid=grid,
        in_specs=[
            pl.BlockSpec((1, tile_n), lambda i: (0, i)),      # x, streamed
            resident((F_PAD, 1)),                             # w1
            resident((F_PAD, 1)),                             # b1
            resident((F_PAD, F_PAD)),                         # w2
            resident((F_PAD, 1)),                             # b2
            resident((F_PAD, 1)),                             # w3
            pl.BlockSpec((1, 1), lambda i: (0, 0),
                         memory_space=pltpu.MemorySpace.SMEM),  # b3 scalar
        ],
        out_specs=pl.BlockSpec((1, tile_n), lambda i: (0, i)),  # lane-dense output
        compiler_params=pltpu.CompilerParams(
            dimension_semantics=("parallel",)),
    )(xt, w1_k, b1_k, w2_k, b2_k, w3_k, b3_k)

    return yt[0, :n].reshape(n, 1)


def init_params(key):
    """Deterministic init mimicking PyTorch Linear default (U[-1/sqrt(fan_in), +])."""
    def linear(key, fan_in, fan_out):
        kw, kb = jax.random.split(key)
        bound = 1.0 / jnp.sqrt(jnp.float32(fan_in))
        w = jax.random.uniform(kw, (fan_in, fan_out), jnp.float32, -bound, bound)
        b = jax.random.uniform(kb, (1, fan_out), jnp.float32, -bound, bound)
        return w, b

    k1, k2, k3 = jax.random.split(key, 3)
    w1, b1 = linear(k1, 1, F)
    w2, b2 = linear(k2, F, F)
    w3, b3 = linear(k3, F, 1)
    return w1, b1, w2, b2, w3, b3


def reference_forward(x, w1, b1, w2, b2, w3, b3):
    h1 = jnp.maximum(x @ w1 + b1, 0.0)
    h2 = jnp.maximum(h1 @ w2 + b2, 0.0)
    return h2 @ w3 + b3


if __name__ == "__main__":
    key = jax.random.PRNGKey(0)
    kx, kp = jax.random.split(key)

    # Batched forward: at N ~ 8 the call is pure launch overhead, so the demo
    # uses a modest batch that exercises the grid (4 lane-dense tiles of 512).
    N = 2048
    x = jax.random.uniform(kx, (N, 1), jnp.float32, -1.0, 1.0)
    params = init_params(kp)

    y = lr_net_forward(x, *params)
    jax.block_until_ready(y)

    y_ref = reference_forward(x, *params)
    assert y.shape == (N, 1)
    assert jnp.allclose(y, y_ref, atol=1e-5, rtol=1e-5)

    print("KERNEL_OK")
</pallas_src>

<mosaic_0001>
module attributes {stable_mosaic.version = 11 : i64} {
  func.func @lr_net_kernel(%arg0: i32, %arg1: memref<1x512xf32, #tpu.memory_space<vmem>>, %arg2: memref<16x1xf32, #tpu.memory_space<vmem>>, %arg3: memref<16x1xf32, #tpu.memory_space<vmem>>, %arg4: memref<16x16xf32, #tpu.memory_space<vmem>>, %arg5: memref<16x1xf32, #tpu.memory_space<vmem>>, %arg6: memref<16x1xf32, #tpu.memory_space<vmem>>, %arg7: memref<1x1xf32, #tpu.memory_space<smem>>, %arg8: memref<1x512xf32, #tpu.memory_space<vmem>>) attributes {dimension_semantics = [#tpu.dimension_semantics<parallel>], iteration_bounds = array<i64: 4>, scalar_prefetch = 0 : i64, scratch_operands = 0 : i64, tpu.core_type = #tpu.core_type<tc>, window_params = [{transform_indices = @transform_0, window_bounds = array<i64: 1, 512>}, {pipeline_mode = #tpu.pipeline_mode<synchronous>, transform_indices = @transform_1, window_bounds = array<i64: 16, 1>}, {pipeline_mode = #tpu.pipeline_mode<synchronous>, transform_indices = @transform_2, window_bounds = array<i64: 16, 1>}, {pipeline_mode = #tpu.pipeline_mode<synchronous>, transform_indices = @transform_3, window_bounds = array<i64: 16, 16>}, {pipeline_mode = #tpu.pipeline_mode<synchronous>, transform_indices = @transform_4, window_bounds = array<i64: 16, 1>}, {pipeline_mode = #tpu.pipeline_mode<synchronous>, transform_indices = @transform_5, window_bounds = array<i64: 16, 1>}, {transform_indices = @transform_6, window_bounds = array<i64: 1, 1>}, {transform_indices = @transform_7, window_bounds = array<i64: 1, 512>}]} {
    %c0 = arith.constant 0 : index
    %c0_0 = arith.constant 0 : index
    %0 = vector.load %arg1[%c0, %c0_0] : memref<1x512xf32, #tpu.memory_space<vmem>>, vector<1x512xf32>
    %c0_1 = arith.constant 0 : index
    %c0_2 = arith.constant 0 : index
    %1 = vector.load %arg2[%c0_1, %c0_2] : memref<16x1xf32, #tpu.memory_space<vmem>>, vector<16x1xf32>
    %2 = vector.broadcast %1 : vector<16x1xf32> to vector<16x512xf32>
    %3 = vector.broadcast %0 : vector<1x512xf32> to vector<16x512xf32>
    %4 = arith.mulf %2, %3 : vector<16x512xf32>
    %c0_3 = arith.constant 0 : index
    %c0_4 = arith.constant 0 : index
    %5 = vector.load %arg3[%c0_3, %c0_4] : memref<16x1xf32, #tpu.memory_space<vmem>>, vector<16x1xf32>
    %6 = vector.broadcast %5 : vector<16x1xf32> to vector<16x512xf32>
    %7 = arith.addf %4, %6 : vector<16x512xf32>
    %cst = arith.constant 0.000000e+00 : f32
    %8 = vector.broadcast %cst : f32 to vector<16x512xf32>
    %9 = arith.maximumf %7, %8 : vector<16x512xf32>
    %c0_5 = arith.constant 0 : index
    %c0_6 = arith.constant 0 : index
    %10 = vector.load %arg4[%c0_5, %c0_6] : memref<16x16xf32, #tpu.memory_space<vmem>>, vector<16x16xf32>
    %cst_7 = arith.constant dense<0.000000e+00> : vector<16x512xf32>
    %11 = tpu.matmul %10, %9, %cst_7 {dimension_numbers = #tpu.dot_dimension_numbers<[1], [0], [0], [1], [0, 0, 1, 1], [], []>} : vector<16x16xf32>, vector<16x512xf32>, vector<16x512xf32> -> vector<16x512xf32>
    %c0_8 = arith.constant 0 : index
    %c0_9 = arith.constant 0 : index
    %12 = vector.load %arg5[%c0_8, %c0_9] : memref<16x1xf32, #tpu.memory_space<vmem>>, vector<16x1xf32>
    %13 = vector.broadcast %12 : vector<16x1xf32> to vector<16x512xf32>
    %14 = arith.addf %11, %13 : vector<16x512xf32>
    %cst_10 = arith.constant 0.000000e+00 : f32
    %15 = vector.broadcast %cst_10 : f32 to vector<16x512xf32>
    %16 = arith.maximumf %14, %15 : vector<16x512xf32>
    %c0_11 = arith.constant 0 : index
    %c0_12 = arith.constant 0 : index
    %17 = vector.load %arg6[%c0_11, %c0_12] : memref<16x1xf32, #tpu.memory_space<vmem>>, vector<16x1xf32>
    %18 = vector.broadcast %17 : vector<16x1xf32> to vector<16x512xf32>
    %19 = arith.mulf %18, %16 : vector<16x512xf32>
    %cst_13 = arith.constant dense<0.000000e+00> : vector<512xf32>
    %20 = vector.multi_reduction <add>, %19, %cst_13 [0] : vector<16x512xf32> to vector<512xf32>
    %21 = vector.shape_cast %20 : vector<512xf32> to vector<1x512xf32>
    %c0_14 = arith.constant 0 : index
    %c0_15 = arith.constant 0 : index
    %22 = memref.load %arg7[%c0_14, %c0_15] : memref<1x1xf32, #tpu.memory_space<smem>>
    %23 = vector.broadcast %22 : f32 to vector<1x512xf32>
    %24 = arith.addf %21, %23 : vector<1x512xf32>
    %c0_16 = arith.constant 0 : index
    %c0_17 = arith.constant 0 : index
    %25 = vector.load %arg8[%c0_16, %c0_17] : memref<1x512xf32, #tpu.memory_space<vmem>>, vector<1x512xf32>
    tpu.vector_store %arg8[%c0_16, %c0_17], %24 {strides = array<i32>} : memref<1x512xf32, #tpu.memory_space<vmem>>, vector<1x512xf32>,
    return
  }
  func.func @transform_0(%arg0: i32) -> (i32, i32) {
    %c0_i32 = arith.constant 0 : i32
    %c0_i32_0 = arith.constant 0 : i32
    return %c0_i32, %arg0 : i32, i32
  }
  func.func @transform_1(%arg0: i32) -> (i32, i32) {
    %c0_i32 = arith.constant 0 : i32
    %c0_i32_0 = arith.constant 0 : i32
    %c0_i32_1 = arith.constant 0 : i32
    return %c0_i32, %c0_i32_0 : i32, i32
  }
  func.func @transform_2(%arg0: i32) -> (i32, i32) {
    %c0_i32 = arith.constant 0 : i32
    %c0_i32_0 = arith.constant 0 : i32
    %c0_i32_1 = arith.constant 0 : i32
    return %c0_i32, %c0_i32_0 : i32, i32
  }
  func.func @transform_3(%arg0: i32) -> (i32, i32) {
    %c0_i32 = arith.constant 0 : i32
    %c0_i32_0 = arith.constant 0 : i32
    %c0_i32_1 = arith.constant 0 : i32
    return %c0_i32, %c0_i32_0 : i32, i32
  }
  func.func @transform_4(%arg0: i32) -> (i32, i32) {
    %c0_i32 = arith.constant 0 : i32
    %c0_i32_0 = arith.constant 0 : i32
    %c0_i32_1 = arith.constant 0 : i32
    return %c0_i32, %c0_i32_0 : i32, i32
  }
  func.func @transform_5(%arg0: i32) -> (i32, i32) {
    %c0_i32 = arith.constant 0 : i32
    %c0_i32_0 = arith.constant 0 : i32
    %c0_i32_1 = arith.constant 0 : i32
    return %c0_i32, %c0_i32_0 : i32, i32
  }
  func.func @transform_6(%arg0: i32) -> (i32, i32) {
    %c0_i32 = arith.constant 0 : i32
    %c0_i32_0 = arith.constant 0 : i32
    %c0_i32_1 = arith.constant 0 : i32
    return %c0_i32, %c0_i32_0 : i32, i32
  }
  func.func @transform_7(%arg0: i32) -> (i32, i32) {
    %c0_i32 = arith.constant 0 : i32
    %c0_i32_0 = arith.constant 0 : i32
    return %c0_i32, %arg0 : i32, i32
  }
}

</mosaic_0001>

<llo_original>
// kernel: tpu_custom_call.1
$region0: #{tpu_custom_call.1}
  #allocation0 [shape = 'u32[]', space=smem, size = 0x4, offset = 0x4, fixed_abs, tag = 'smem constant byte address 0x4 - core index']
  #allocation1 [shape = 'u32[144,128]{1,0:T(1,128)}', space=vmem, size = 0x12000, scoped, tag = 'internal scratch']
  #allocation2 [shape = 'f32[1,1]{1,0:T(1,128)S(6)}', space=smem, size = 0x200, scoped, tag = 'scoped memory for tpu_custom_call.1']
  %s0 = inlined_call_operand.vmem [shape: f32[1,2048], index: 0, kind: input, shape index: {}]
  %s1 = inlined_call_operand.vmem [shape: f32[16,1], index: 1, kind: input, shape index: {}]
  %s2 = inlined_call_operand.vmem [shape: f32[16,1], index: 2, kind: input, shape index: {}]
  %s3 = inlined_call_operand.vmem [shape: f32[16,16], index: 3, kind: input, shape index: {}]
  %s4 = inlined_call_operand.vmem [shape: f32[16,1], index: 4, kind: input, shape index: {}]
  %s5 = inlined_call_operand.vmem [shape: f32[16,1], index: 5, kind: input, shape index: {}]
  %s6 = inlined_call_operand.<no memory space> [shape: f32[1,1], index: 6, kind: input, shape index: {}]
  %s7 = inlined_call_operand.hbm [shape: f32[1,2048], index: 7, kind: output, shape index: {}]
  %s8 = sld [smem:[#allocation0]]
  $region61: #{tpu_custom_call.1} parent=0
    _
  %s10 = ssub.s32 1, %s8
  %s11 = scalar_select 0, %s10, %s8
  %12 = sst [smem:[#allocation2]] %s6
  $region1: #{tpu_custom_call.1} parent=0
    #allocation3 [shape = 'u8[4096]{0}', space=vmem, size = 0x1000, scoped, tag = 'output window, operand 0']
    #allocation4 [shape = 's32[2]{0}', space=sflag, size = 0x8, scoped, tag = 'scoped memory for tpu_custom_call.1']
    %13 = vsyncpa [#allocation4], 0
    %s14 = scalar_lea.sflag [#allocation4], 1
    %15 = vsyncpa %s14, 0
    loop: start=0, step=1, limit=6
    $region2: #{tpu_custom_call.1} parent=1 // loop_pre_header
      _
    $region3: #{tpu_custom_call.1} parent=1 // loop_header
      %s17 = sphi 0, %s21
      %p18 = scmp.ge.s32.totalorder %s17, 6
      %s27 = sphi 0, %s29
      %s30 = sphi 0, %s27
      %s31 = sphi 0, %s30
      %s47 = sphi 0, %s31
      %s51 = sphi 0, %s51
      %s53 = sphi 0, %s51
      %s54 = sphi 0, %s53
      %s68 = sphi 0, %s54
      %s72 = sphi 0, %s72
      %s74 = sphi 0, %s72
      %s75 = sphi 0, %s74
      %s89 = sphi 0, %s75
      %s93 = sphi 0, %s93
      %s95 = sphi 0, %s93
      %s96 = sphi 0, %s95
      %s110 = sphi 0, %s96
      %s114 = sphi 0, %s114
      %s116 = sphi 0, %s114
      %s117 = sphi 0, %s116
      %s131 = sphi 0, %s117
      %s135 = sphi 0, %s135
      %s137 = sphi 0, %s135
      %s138 = sphi 0, %s137
      %s152 = sphi 0, %s138
      %s156 = sphi 0, %s156
      %s158 = sphi 0, %s156
      %s159 = sphi 0, %s158
      %s173 = sphi 0, %s159
      %s179 = sphi 0, %s181
      %s182 = sphi 0, %s179
      %s183 = sphi 0, %s182
      %s199 = sphi 0, %s183
    $region4: #{tpu_custom_call.1} parent=1 // loop_header_branch
      %20 = sbr.rel (%p18) target = $region8
    $region5: #{tpu_custom_call.1} parent=1 // loop_body
      %s22 = ssub.s32 %s17, 1
      %s23 = ssub.s32 %s17, 2
      %s24 = sadd.s32 %s17, 1
      %s25 = ssub.s32 %s17, %s24
      %p26 = scmp.eq.s32.totalorder %s25, 0
      %s28 = sadd.s32 %s27, 1
      %s29 = scalar_select %p26, %s27, %s28
      %p32 = pneg %p26
      %p33 = scmp.eq.s32.totalorder %s17, 3
      %p34 = por %p32, %p33
      %p35 = scmp.ne.s32.totalorder %s27, %s30
      %p36 = scmp.eq.s32.totalorder %s17, 0
      %p37 = por %p35, %p36
      %p38 = scmp.ne.s32.totalorder %s27, %s30
      %p39 = scmp.eq.s32.totalorder %s22, 3
      %p40 = por %p38, %p39
      %p41 = scmp.ne.s32.totalorder %s30, %s31
      %p42 = scmp.eq.s32.totalorder %s22, 0
      %p43 = por %p41, %p42
      %p44 = scmp.ne.s32.totalorder %s30, %s31
      %p45 = scmp.eq.s32.totalorder %s23, 3
      %p46 = por %p44, %p45
      %p48 = scmp.ne.s32.totalorder %s31, %s47
      %p49 = scmp.eq.s32.totalorder %s23, 0
      %p50 = por %p48, %p49
      %s52 = sadd.s32 %s51, 1
      %p55 = scmp.eq.s32.totalorder %s17, 3
      %p56 = scmp.ne.s32.totalorder %s51, %s53
      %p57 = scmp.eq.s32.totalorder %s17, 0
      %p58 = por %p56, %p57
      %p59 = scmp.ne.s32.totalorder %s51, %s53
      %p60 = scmp.eq.s32.totalorder %s22, 3
      %p61 = por %p59, %p60
      %p62 = scmp.ne.s32.totalorder %s53, %s54
      %p63 = scmp.eq.s32.totalorder %s22, 0
      %p64 = por %p62, %p63
      %p65 = scmp.ne.s32.totalorder %s53, %s54
      %p66 = scmp.eq.s32.totalorder %s23, 3
      %p67 = por %p65, %p66
      %p69 = scmp.ne.s32.totalorder %s54, %s68
      %p70 = scmp.eq.s32.totalorder %s23, 0
      %p71 = por %p69, %p70
      %s73 = sadd.s32 %s72, 1
      %p76 = scmp.eq.s32.totalorder %s17, 3
      %p77 = scmp.ne.s32.totalorder %s72, %s74
      %p78 = scmp.eq.s32.totalorder %s17, 0
      %p79 = por %p77, %p78
      %p80 = scmp.ne.s32.totalorder %s72, %s74
      %p81 = scmp.eq.s32.totalorder %s22, 3
      %p82 = por %p80, %p81
      %p83 = scmp.ne.s32.totalorder %s74, %s75
      %p84 = scmp.eq.s32.totalorder %s22, 0
      %p85 = por %p83, %p84
      %p86 = scmp.ne.s32.totalorder %s74, %s75
      %p87 = scmp.eq.s32.totalorder %s23, 3
      %p88 = por %p86, %p87
      %p90 = scmp.ne.s32.totalorder %s75, %s89
      %p91 = scmp.eq.s32.totalorder %s23, 0
      %p92 = por %p90, %p91
      %s94 = sadd.s32 %s93, 1
      %p97 = scmp.eq.s32.totalorder %s17, 3
      %p98 = scmp.ne.s32.totalorder %s93, %s95
      %p99 = scmp.eq.s32.totalorder %s17, 0
      %p100 = por %p98, %p99
      %p101 = scmp.ne.s32.totalorder %s93, %s95
      %p102 = scmp.eq.s32.totalorder %s22, 3
      %p103 = por %p101, %p102
      %p104 = scmp.ne.s32.totalorder %s95, %s96
      %p105 = scmp.eq.s32.totalorder %s22, 0
      %p106 = por %p104, %p105
      %p107 = scmp.ne.s32.totalorder %s95, %s96
      %p108 = scmp.eq.s32.totalorder %s23, 3
      %p109 = por %p107, %p108
      %p111 = scmp.ne.s32.totalorder %s96, %s110
      %p112 = scmp.eq.s32.totalorder %s23, 0
      %p113 = por %p111, %p112
      %s115 = sadd.s32 %s114, 1
      %p118 = scmp.eq.s32.totalorder %s17, 3
      %p119 = scmp.ne.s32.totalorder %s114, %s116
      %p120 = scmp.eq.s32.totalorder %s17, 0
      %p121 = por %p119, %p120
      %p122 = scmp.ne.s32.totalorder %s114, %s116
      %p123 = scmp.eq.s32.totalorder %s22, 3
      %p124 = por %p122, %p123
      %p125 = scmp.ne.s32.totalorder %s116, %s117
      %p126 = scmp.eq.s32.totalorder %s22, 0
      %p127 = por %p125, %p126
      %p128 = scmp.ne.s32.totalorder %s116, %s117
      %p129 = scmp.eq.s32.totalorder %s23, 3
      %p130 = por %p128, %p129
      %p132 = scmp.ne.s32.totalorder %s117, %s131
      %p133 = scmp.eq.s32.totalorder %s23, 0
      %p134 = por %p132, %p133
      %s136 = sadd.s32 %s135, 1
      %p139 = scmp.eq.s32.totalorder %s17, 3
      %p140 = scmp.ne.s32.totalorder %s135, %s137
      %p141 = scmp.eq.s32.totalorder %s17, 0
      %p142 = por %p140, %p141
      %p143 = scmp.ne.s32.totalorder %s135, %s137
      %p144 = scmp.eq.s32.totalorder %s22, 3
      %p145 = por %p143, %p144
      %p146 = scmp.ne.s32.totalorder %s137, %s138
      %p147 = scmp.eq.s32.totalorder %s22, 0
      %p148 = por %p146, %p147
      %p149 = scmp.ne.s32.totalorder %s137, %s138
      %p150 = scmp.eq.s32.totalorder %s23, 3
      %p151 = por %p149, %p150
      %p153 = scmp.ne.s32.totalorder %s138, %s152
      %p154 = scmp.eq.s32.totalorder %s23, 0
      %p155 = por %p153, %p154
      %s157 = sadd.s32 %s156, 1
      %p160 = scmp.eq.s32.totalorder %s17, 3
      %p161 = scmp.ne.s32.totalorder %s156, %s158
      %p162 = scmp.eq.s32.totalorder %s17, 0
      %p163 = por %p161, %p162
      %p164 = scmp.ne.s32.totalorder %s156, %s158
      %p165 = scmp.eq.s32.totalorder %s22, 3
      %p166 = por %p164, %p165
      %p167 = scmp.ne.s32.totalorder %s158, %s159
      %p168 = scmp.eq.s32.totalorder %s22, 0
      %p169 = por %p167, %p168
      %p170 = scmp.ne.s32.totalorder %s158, %s159
      %p171 = scmp.eq.s32.totalorder %s23, 3
      %p172 = por %p170, %p171
      %p174 = scmp.ne.s32.totalorder %s159, %s173
      %p175 = scmp.eq.s32.totalorder %s23, 0
      %p176 = por %p174, %p175
      %s177 = ssub.s32 %s17, %s24
      %p178 = scmp.eq.s32.totalorder %s177, 0
      %s180 = sadd.s32 %s179, 1
      %s181 = scalar_select %p178, %s179, %s180
      %p184 = pneg %p178
      %p185 = scmp.eq.s32.totalorder %s17, 3
      %p186 = por %p184, %p185
      %p187 = scmp.ne.s32.totalorder %s179, %s182
      %p188 = scmp.eq.s32.totalorder %s17, 0
      %p189 = por %p187, %p188
      %p190 = scmp.ne.s32.totalorder %s179, %s182
      %p191 = scmp.eq.s32.totalorder %s22, 3
      %p192 = por %p190, %p191
      %p193 = scmp.ne.s32.totalorder %s182, %s183
      %p194 = scmp.eq.s32.totalorder %s22, 0
      %p195 = por %p193, %p194
      %p196 = scmp.ne.s32.totalorder %s182, %s183
      %p197 = scmp.eq.s32.totalorder %s23, 3
      %p198 = por %p196, %p197
      %p200 = scmp.ne.s32.totalorder %s183, %s199
      %p201 = scmp.eq.s32.totalorder %s23, 0
      %p202 = por %p200, %p201
      %p203 = scmp.le.s32.totalorder 1, %s17
      %p204 = scmp.lt.s32.totalorder %s17, 5
      %p205 = pnand %p203, %p204
      %p206 = pneg %p205
      // Predicated region
      $region9: #{tpu_custom_call.1} parent=5 // pred_check
        _
      $region10: #{tpu_custom_call.1} parent=5 // pred_check_branch
        %208 = sbr.rel (%p205) target = $region12
      $region11: #{tpu_custom_call.1} parent=5 // pred_region
        %s209 = ssub.s32 %s17, 1
        // Predicated region
        $region13: #{tpu_custom_call.1} parent=11 // pred_check
          %p210 = pneg %p64
        $region14: #{tpu_custom_call.1} parent=11 // pred_check_branch
          %212 = sbr.rel (%p210) target = $region16
        $region15: #{tpu_custom_call.1} parent=11 // pred_region
          _
        $region16: #{tpu_custom_call.1} parent=11 // pred_fallthru
          _
        // Predicated region
        $region17: #{tpu_custom_call.1} parent=11 // pred_check
          %p213 = pneg %p85
        $region18: #{tpu_custom_call.1} parent=11 // pred_check_branch
          %215 = sbr.rel (%p213) target = $region20
        $region19: #{tpu_custom_call.1} parent=11 // pred_region
          _
        $region20: #{tpu_custom_call.1} parent=11 // pred_fallthru
          _
        // Predicated region
        $region21: #{tpu_custom_call.1} parent=11 // pred_check
          %p216 = pneg %p106
        $region22: #{tpu_custom_call.1} parent=11 // pred_check_branch
          %218 = sbr.rel (%p216) target = $region24
        $region23: #{tpu_custom_call.1} parent=11 // pred_region
          _
        $region24: #{tpu_custom_call.1} parent=11 // pred_fallthru
          _
        // Predicated region
        $region25: #{tpu_custom_call.1} parent=11 // pred_check
          %p219 = pneg %p127
        $region26: #{tpu_custom_call.1} parent=11 // pred_check_branch
          %221 = sbr.rel (%p219) target = $region28
        $region27: #{tpu_custom_call.1} parent=11 // pred_region
          _
        $region28: #{tpu_custom_call.1} parent=11 // pred_fallthru
          _
        // Predicated region
        $region29: #{tpu_custom_call.1} parent=11 // pred_check
          %p222 = pneg %p148
        $region30: #{tpu_custom_call.1} parent=11 // pred_check_branch
          %224 = sbr.rel (%p222) target = $region32
        $region31: #{tpu_custom_call.1} parent=11 // pred_region
          _
        $region32: #{tpu_custom_call.1} parent=11 // pred_fallthru
          _
        // Predicated region
        $region33: #{tpu_custom_call.1} parent=11 // pred_check
          %p225 = pneg %p169
        $region34: #{tpu_custom_call.1} parent=11 // pred_check_branch
          %227 = sbr.rel (%p225) target = $region36
        $region35: #{tpu_custom_call.1} parent=11 // pred_region
          _
        $region36: #{tpu_custom_call.1} parent=11 // pred_fallthru
          _
      $region12: #{tpu_custom_call.1} parent=5 // pred_fallthru
        _
      %p228 = scmp.lt.s32.totalorder %s17, 4
      // Predicated region
      $region37: #{tpu_custom_call.1} parent=5 // pred_check
        %p229 = pneg %p228
      $region38: #{tpu_custom_call.1} parent=5 // pred_check_branch
        %231 = sbr.rel (%p229) target = $region40
      $region39: #{tpu_custom_call.1} parent=5 // pred_region
        // Predicated region
        $region41: #{tpu_custom_call.1} parent=39 // pred_check
          %p232 = pneg %p37
        $region42: #{tpu_custom_call.1} parent=39 // pred_check_branch
          %234 = sbr.rel (%p232) target = $region44
        $region43: #{tpu_custom_call.1} parent=39 // pred_region
          %s235 = smul.u32 4, %s17
          %p236 = scmp.lt.s32.totalorder %s235, 15
          %s237 = scalar_select %p236, %s235, 15
          %s238 = scalar_lea.vmem %s0, %s237
          %s239 = smul.u32 4, %s17
        $region44: #{tpu_custom_call.1} parent=39 // pred_fallthru
          _
      $region40: #{tpu_custom_call.1} parent=5 // pred_fallthru
        _
      %p240 = scmp.le.s32.totalorder 1, %s17
      %p241 = scmp.lt.s32.totalorder %s17, 5
      %p242 = pnand %p240, %p241
      %p243 = pneg %p242
      // Predicated region
      $region45: #{tpu_custom_call.1} parent=5 // pred_check
        _
      $region46: #{tpu_custom_call.1} parent=5 // pred_check_branch
        %245 = sbr.rel (%p242) target = $region48
      $region47: #{tpu_custom_call.1} parent=5 // pred_region
        %s246 = ssub.s32 %s17, 1
        %s247 = smul.u32 4, %s22
        %p248 = scmp.lt.s32.totalorder %s247, 15
        %s249 = scalar_select %p248, %s247, 15
        %s250 = scalar_lea.vmem %s0, %s249
        %p251 = pneg %p43
        %p252 = pneg %p40
        %p253 = pneg %p64
        %p254 = pneg %p61
        %p255 = pneg %p85
        %p256 = pneg %p82
        %p257 = pneg %p106
        %p258 = pneg %p103
        %p259 = pneg %p127
        %p260 = pneg %p124
        %p261 = pneg %p148
        %p262 = pneg %p145
        %p263 = pneg %p169
        %p264 = pneg %p166
        %p265 = pneg %p195
        %p266 = pneg %p192
        %s267 = sand.u32 %s182, 1
        %s268 = scalar_lea.sflag [#allocation4], %s267
        %s269 = sand.u32 %s182, 1
        %s270 = smul.addr %s269, 4
        %s271 = scalar_lea.vmem [#allocation3], %s270
        %s272 = smul.u32 4, %s22
        %p273 = scmp.lt.s32.totalorder %s272, 15
        %s274 = scalar_select %p273, %s272, 15
        %s275 = scalar_lea.vmem %s0, %s274
        %s276 = smul.u32 4, %s22
        %s277 = smul.u32 4, %s22
        %v278 = vld [vmem:[%s275] sm:$0xf]
        %v279 = vld [vmem:[%s1] sm:$0xff]
        %v280 = vld [vmem:[%s1 + $0x8] sm:$0xff]
        %282 = vset.pattern.permute.xlu0 0
        %283 = vperm.xlu0 %282, %v279
        %v284 = vpop.permute.xlu0 %283
        %287 = vset.pattern.permute.xlu0 0
        %288 = vperm.xlu0 %287, %v280
        %v289 = vpop.permute.xlu0 %288
        %v292 = vlaneseq
        %v293 = vshrl.u32 %v292, 7
        %v294 = vsub.s32 0, %v293
        %v295 = vrot.slane %v278, %v294
        %v296 = vlaneseq
        %v297 = vshrl.u32 %v296, 7
        %v298 = vsub.s32 1, %v297
        %v299 = vrot.slane %v278, %v298
        %v300 = vlaneseq
        %v301 = vshrl.u32 %v300, 7
        %v302 = vsub.s32 2, %v301
        %v303 = vrot.slane %v278, %v302
        %v304 = vlaneseq
        %v305 = vshrl.u32 %v304, 7
        %v306 = vsub.s32 3, %v305
        %v307 = vrot.slane %v278, %v306
        %v312 = vmul.f32 %v284, %v295
        %v313 = vmul.f32 %v284, %v299
        %v314 = vmul.f32 %v284, %v303
        %v315 = vmul.f32 %v284, %v307
        %v316 = vmul.f32 %v289, %v295
        %v317 = vmul.f32 %v289, %v299
        %v318 = vmul.f32 %v289, %v303
        %v319 = vmul.f32 %v289, %v307
        %v320 = vld [vmem:[%s2] sm:$0xff]
        %v321 = vld [vmem:[%s2 + $0x8] sm:$0xff]
        %323 = vset.pattern.permute.xlu0 0
        %324 = vperm.xlu0 %323, %v320
        %v325 = vpop.permute.xlu0 %324
        %328 = vset.pattern.permute.xlu0 0
        %329 = vperm.xlu0 %328, %v321
        %v330 = vpop.permute.xlu0 %329
        %v332 = vadd.f32 %v312, %v325
        %v333 = vadd.f32 %v313, %v325
        %v334 = vadd.f32 %v314, %v325
        %v335 = vadd.f32 %v315, %v325
        %v336 = vadd.f32 %v316, %v330
        %v337 = vadd.f32 %v317, %v330
        %v338 = vadd.f32 %v318, %v330
        %v339 = vadd.f32 %v319, %v330
        %v340 = vmax.f32 %v332, 0.0
        %v341 = vmax.f32 %v333, 0.0
        %v342 = vmax.f32 %v334, 0.0
        %v343 = vmax.f32 %v335, 0.0
        %v344 = vmax.f32 %v336, 0.0
        %v345 = vmax.f32 %v337, 0.0
        %v346 = vmax.f32 %v338, 0.0
        %v347 = vmax.f32 %v339, 0.0
        %v348 = vld [vmem:[%s3] sm:$0xff]
        %v349 = vld [vmem:[%s3 + $0x8] sm:$0xff]
        %v350 = vld [vmem:[%s4] sm:$0xff]
        %v351 = vld [vmem:[%s4 + $0x8] sm:$0xff]
        %353 = vset.pattern.permute.xlu0 0
        %354 = vperm.xlu0 %353, %v350
        %v355 = vpop.permute.xlu0 %354
        %358 = vset.pattern.permute.xlu0 0
        %359 = vperm.xlu0 %358, %v351
        %v360 = vpop.permute.xlu0 %359
        %vm362 = vcmask 130048
        %v364 = vsel %vm362, %v348, 0
        %v367 = vsel %vm362, %v349, 0
        %369 = vmatprep.subr.mxu0 0.0
        %370 = vmatpush1.msra.mxu0 0.0
        %371 = vmatprep.subr.mxu0 0.0
        %372 = vmatpush1.msra.mxu0 0.0
        %373 = vmatprep.subr.mxu0 0.0
        %374 = vmatpush1.msra.mxu0 0.0
        %375 = vmatprep.subr.mxu0 0.0
        %376 = vmatpush1.msra.mxu0 0.0
        %377 = vmatprep.subr.mxu0 0.0
        %378 = vmatpush1.msra.mxu0 0.0
        %379 = vmatprep.subr.mxu0 0.0
        %380 = vmatpush1.msra.mxu0 0.0
        %381 = vmatprep.subr.mxu0 0.0
        %382 = vmatpush1.msra.mxu0 0.0
        %383 = vmatprep.subr.mxu0 0.0
        %384 = vmatpush1.msra.mxu0 0.0
        %385 = vmatprep.subr.mxu0 0.0
        %386 = vmatpush1.msra.mxu0 0.0
        %387 = vmatprep.subr.mxu0 0.0
        %388 = vmatpush1.msra.mxu0 0.0
        %389 = vmatprep.subr.mxu0 0.0
        %390 = vmatpush1.msra.mxu0 0.0
        %391 = vmatprep.subr.mxu0 0.0
        %392 = vmatpush1.msra.mxu0 0.0
        %393 = vmatprep.subr.mxu0 0.0
        %394 = vmatpush1.msra.mxu0 0.0
        %395 = vmatprep.subr.mxu0 0.0
        %396 = vmatpush1.msra.mxu0 0.0
        %397 = vmatprep.subr.mxu0 %v345
        %398 = vmatpush1.msra.mxu0 %v344
        %399 = vmatprep.subr.mxu0 %v341
        %400 = vmatpush1.msra.mxu0 %v340
        %401 = vmatprep.subr.mxu0 0.0
        %402 = vmatpush2.msra.mxu0 0.0
        %403 = vmatprep.subr.mxu0 0.0
        %404 = vmatpush2.msra.mxu0 0.0
        %405 = vmatprep.subr.mxu0 0.0
        %406 = vmatpush2.msra.mxu0 0.0
        %407 = vmatprep.subr.mxu0 0.0
        %408 = vmatpush2.msra.mxu0 0.0
        %409 = vmatprep.subr.mxu0 0.0
        %410 = vmatpush2.msra.mxu0 0.0
        %411 = vmatprep.subr.mxu0 0.0
        %412 = vmatpush2.msra.mxu0 0.0
        %413 = vmatprep.subr.mxu0 0.0
        %414 = vmatpush2.msra.mxu0 0.0
        %415 = vmatprep.subr.mxu0 0.0
        %416 = vmatpush2.msra.mxu0 0.0
        %417 = vmatprep.subr.mxu0 0.0
        %418 = vmatpush2.msra.mxu0 0.0
        %419 = vmatprep.subr.mxu0 0.0
        %420 = vmatpush2.msra.mxu0 0.0
        %421 = vmatprep.subr.mxu0 0.0
        %422 = vmatpush2.msra.mxu0 0.0
        %423 = vmatprep.subr.mxu0 0.0
        %424 = vmatpush2.msra.mxu0 0.0
        %425 = vmatprep.subr.mxu0 0.0
        %426 = vmatpush2.msra.mxu0 0.0
        %427 = vmatprep.subr.mxu0 0.0
        %428 = vmatpush2.msra.mxu0 0.0
        %429 = vmatprep.subr.mxu0 0.0
        %430 = vmatpush2.msra.mxu0 0.0
        %431 = vmatprep.subr.mxu0 0.0
        %432 = vmatpush2.msra.mxu0 0.0
        %433 = vmatprep.mubr.f32.mxu0 0.0
        %434 = vmatmul.mubr.f32.gmra.mxu0 %v364
        %v435 = vpop.f32.mrf.mxu0
        %v436 = vadd.f32 %v355, %v435
        %v437 = vpop.f32.mrf.mxu0
        %v438 = vadd.f32 %v355, %v437
        %439 = vmatprep.mubr.f32.mxu0 0.0
        %440 = vmatmul.mubr.f32.gmra.mxu0 %v367
        %v441 = vpop.f32.mrf.mxu0
        %v442 = vadd.f32 %v360, %v441
        %v443 = vpop.f32.mrf.mxu0
        %v444 = vadd.f32 %v360, %v443
        %445 = vdwg.mxu0
        %446 = vmatprep.subr.mxu0 0.0
        %447 = vmatpush1.msra.mxu0 0.0
        %448 = vmatprep.subr.mxu0 0.0
        %449 = vmatpush1.msra.mxu0 0.0
        %450 = vmatprep.subr.mxu0 0.0
        %451 = vmatpush1.msra.mxu0 0.0
        %452 = vmatprep.subr.mxu0 0.0
        %453 = vmatpush1.msra.mxu0 0.0
        %454 = vmatprep.subr.mxu0 0.0
        %455 = vmatpush1.msra.mxu0 0.0
        %456 = vmatprep.subr.mxu0 0.0
        %457 = vmatpush1.msra.mxu0 0.0
        %458 = vmatprep.subr.mxu0 0.0
        %459 = vmatpush1.msra.mxu0 0.0
        %460 = vmatprep.subr.mxu0 0.0
        %461 = vmatpush1.msra.mxu0 0.0
        %462 = vmatprep.subr.mxu0 0.0
        %463 = vmatpush1.msra.mxu0 0.0
        %464 = vmatprep.subr.mxu0 0.0
        %465 = vmatpush1.msra.mxu0 0.0
        %466 = vmatprep.subr.mxu0 0.0
        %467 = vmatpush1.msra.mxu0 0.0
        %468 = vmatprep.subr.mxu0 0.0
        %469 = vmatpush1.msra.mxu0 0.0
        %470 = vmatprep.subr.mxu0 0.0
        %471 = vmatpush1.msra.mxu0 0.0
        %472 = vmatprep.subr.mxu0 0.0
        %473 = vmatpush1.msra.mxu0 0.0
        %474 = vmatprep.subr.mxu0 %v347
        %475 = vmatpush1.msra.mxu0 %v346
        %476 = vmatprep.subr.mxu0 %v343
        %477 = vmatpush1.msra.mxu0 %v342
        %478 = vmatprep.subr.mxu0 0.0
        %479 = vmatpush2.msra.mxu0 0.0
        %480 = vmatprep.subr.mxu0 0.0
        %481 = vmatpush2.msra.mxu0 0.0
        %482 = vmatprep.subr.mxu0 0.0
        %483 = vmatpush2.msra.mxu0 0.0
        %484 = vmatprep.subr.mxu0 0.0
        %485 = vmatpush2.msra.mxu0 0.0
        %486 = vmatprep.subr.mxu0 0.0
        %487 = vmatpush2.msra.mxu0 0.0
        %488 = vmatprep.subr.mxu0 0.0
        %489 = vmatpush2.msra.mxu0 0.0
        %490 = vmatprep.subr.mxu0 0.0
        %491 = vmatpush2.msra.mxu0 0.0
        %492 = vmatprep.subr.mxu0 0.0
        %493 = vmatpush2.msra.mxu0 0.0
        %494 = vmatprep.subr.mxu0 0.0
        %495 = vmatpush2.msra.mxu0 0.0
        %496 = vmatprep.subr.mxu0 0.0
        %497 = vmatpush2.msra.mxu0 0.0
        %498 = vmatprep.subr.mxu0 0.0
        %499 = vmatpush2.msra.mxu0 0.0
        %500 = vmatprep.subr.mxu0 0.0
        %501 = vmatpush2.msra.mxu0 0.0
        %502 = vmatprep.subr.mxu0 0.0
        %503 = vmatpush2.msra.mxu0 0.0
        %504 = vmatprep.subr.mxu0 0.0
        %505 = vmatpush2.msra.mxu0 0.0
        %506 = vmatprep.subr.mxu0 0.0
        %507 = vmatpush2.msra.mxu0 0.0
        %508 = vmatprep.subr.mxu0 0.0
        %509 = vmatpush2.msra.mxu0 0.0
        %510 = vmatprep.mubr.f32.mxu0 0.0
        %511 = vmatmul.mubr.f32.gmra.mxu0 %v364
        %v512 = vpop.f32.mrf.mxu0
        %v513 = vadd.f32 %v355, %v512
        %v514 = vpop.f32.mrf.mxu0
        %v515 = vadd.f32 %v355, %v514
        %516 = vmatprep.mubr.f32.mxu0 0.0
        %517 = vmatmul.mubr.f32.gmra.mxu0 %v367
        %v518 = vpop.f32.mrf.mxu0
        %v519 = vadd.f32 %v360, %v518
        %v520 = vpop.f32.mrf.mxu0
        %v521 = vadd.f32 %v360, %v520
        %522 = vdwg.mxu0
        %v523 = vmax.f32 %v436, 0.0
        %v524 = vmax.f32 %v438, 0.0
        %v525 = vmax.f32 %v513, 0.0
        %v526 = vmax.f32 %v515, 0.0
        %v527 = vmax.f32 %v442, 0.0
        %v528 = vmax.f32 %v444, 0.0
        %v529 = vmax.f32 %v519, 0.0
        %v530 = vmax.f32 %v521, 0.0
        %v531 = vld [vmem:[%s5] sm:$0xff]
        %v532 = vld [vmem:[%s5 + $0x8] sm:$0xff]
        %534 = vset.pattern.permute.xlu0 0
        %535 = vperm.xlu0 %534, %v531
        %v536 = vpop.permute.xlu0 %535
        %539 = vset.pattern.permute.xlu0 0
        %540 = vperm.xlu0 %539, %v532
        %v541 = vpop.permute.xlu0 %540
        %v543 = vmul.f32 %v536, %v523
        %v544 = vmul.f32 %v536, %v524
        %v545 = vmul.f32 %v536, %v525
        %v546 = vmul.f32 %v536, %v526
        %v547 = vmul.f32 %v541, %v527
        %v548 = vmul.f32 %v541, %v528
        %v549 = vmul.f32 %v541, %v529
        %v550 = vmul.f32 %v541, %v530
        %v551 = vadd.f32 %v543, %v547
        %v552 = vrot.slane %v551, 4
        %v553 = vadd.f32 %v551, %v552
        %v554 = vrot.slane %v553, 2
        %v555 = vadd.f32 %v553, %v554
        %v556 = vrot.slane %v555, 1
        %v557 = vadd.f32 %v555, %v556
        %v558 = vadd.f32 %v544, %v548
        %v559 = vrot.slane %v558, 4
        %v560 = vadd.f32 %v558, %v559
        %v561 = vrot.slane %v560, 2
        %v562 = vadd.f32 %v560, %v561
        %v563 = vrot.slane %v562, 1
        %v564 = vadd.f32 %v562, %v563
        %v565 = vadd.f32 %v545, %v549
        %v566 = vrot.slane %v565, 4
        %v567 = vadd.f32 %v565, %v566
        %v568 = vrot.slane %v567, 2
        %v569 = vadd.f32 %v567, %v568
        %v570 = vrot.slane %v569, 1
        %v571 = vadd.f32 %v569, %v570
        %v572 = vadd.f32 %v546, %v550
        %v573 = vrot.slane %v572, 4
        %v574 = vadd.f32 %v572, %v573
        %v575 = vrot.slane %v574, 2
        %v576 = vadd.f32 %v574, %v575
        %v577 = vrot.slane %v576, 1
        %v578 = vadd.f32 %v576, %v577
        %s579 = sld [smem:[#allocation2]]
        %v580 = vstv %s579
        %v581 = vadd.f32 %v557, %v580
        %v582 = vadd.f32 %v564, %v580
        %v583 = vadd.f32 %v571, %v580
        %v584 = vadd.f32 %v578, %v580
        %v589 = vcombine.low %v581, %v582
        %v590 = vcombine.low %v583, %v584
        %v592 = vunpack.c.l.s4 1966171168
        %v593 = vunpack.c.0.s8 %v592
        %v594 = vlaneseq
        %v595 = vshrl.u32 %v594, 7
        %v596 = vsub.s32 %v593, %v595
        %v597 = vrot.slane %v589, %v596
        %v599 = vunpack.c.l.s4 1966171168
        %v600 = vunpack.c.0.s8 %v599
        %v601 = vlaneseq
        %v602 = vshrl.u32 %v601, 7
        %v603 = vsub.s32 %v600, %v602
        %v604 = vrot.slane %v590, %v603
        %v605 = vcombine.low %v597, %v604
        %v607 = vunpack.c.l.s4 1966171168
        %v608 = vunpack.c.0.s8 %v607
        %v609 = vlaneseq
        %v610 = vshrl.u32 %v609, 7
        %v611 = vsub.s32 %v608, %v610
        %v612 = vrot.slane %v605, %v611
        %v614 = vlaneseq
        %vm615 = vcmp.ge.s32.totalorder %v614, 0
        %vm616 = vcmp.lt.s32.totalorder %v614, 512
        %vm617 = vmand %vm615, %vm616
        %618 = vst.msk [vmem:[%s271] sm:$0xf] %vm617, %v612
        %s619 = sand.u32 %s182, 1
        %s620 = scalar_lea.sflag [#allocation4], %s619
        %s621 = sand.u32 %s182, 1
        %s622 = smul.addr %s621, 4
        %s623 = scalar_lea.vmem [#allocation3], %s622
        // Predicated region
        $region49: #{tpu_custom_call.1} parent=47 // pred_check
          %p624 = pneg %p192
        $region50: #{tpu_custom_call.1} parent=47 // pred_check_branch
          %626 = sbr.rel (%p624) target = $region52
        $region51: #{tpu_custom_call.1} parent=47 // pred_region
          %s627 = smul.u32 4, %s22
          %s629 = ssub.s32 64, 64
          %630 = vsyncadd %s620, %s629
          %s631 = smul.addr %s627, 16
          %s632 = scalar_lea.hbm %s7, %s631
          %s634 = sshll.u32 %s623, 4
          %s635 = int_to_ptr.vmem [resolvable:$true] %s634
          %637 = dma.vmem_to_hbm [thread:$0]  %s635, 64, %s632, %s620
        $region52: #{tpu_custom_call.1} parent=47 // pred_fallthru
          _
      $region48: #{tpu_custom_call.1} parent=5 // pred_fallthru
        _
      %p638 = scmp.le.s32.totalorder 2, %s17
      // Predicated region
      $region53: #{tpu_custom_call.1} parent=5 // pred_check
        %p639 = pneg %p638
      $region54: #{tpu_custom_call.1} parent=5 // pred_check_branch
        %641 = sbr.rel (%p639) target = $region56
      $region55: #{tpu_custom_call.1} parent=5 // pred_region
        %s642 = ssub.s32 %s17, 2
        // Predicated region
        $region57: #{tpu_custom_call.1} parent=55 // pred_check
          %p643 = pneg %p198
        $region58: #{tpu_custom_call.1} parent=55 // pred_check_branch
          %645 = sbr.rel (%p643) target = $region60
        $region59: #{tpu_custom_call.1} parent=55 // pred_region
          %s646 = sand.u32 %s183, 1
          %s647 = scalar_lea.sflag [#allocation4], %s646
          %s648 = sand.u32 %s183, 1
          %s649 = smul.addr %s648, 4
          %s650 = scalar_lea.vmem [#allocation3], %s649
          %651 = dma.done %s647, 64
        $region60: #{tpu_custom_call.1} parent=55 // pred_fallthru
          _
      $region56: #{tpu_custom_call.1} parent=5 // pred_fallthru
        _
    $region6: #{tpu_custom_call.1} parent=1 // loop_footer
      %s21 = sadd.s32 1, %s17
    $region7: #{tpu_custom_call.1} parent=1 // loop_footer_branch
      %16 = sbr.rel target = $region3
    $region8: #{tpu_custom_call.1} parent=1 // loop_exit
      _
    %652 = vsyncpa [#allocation4], 1
    %s653 = scalar_lea.sflag [#allocation4], 1
    %654 = vsyncpa %s653, 1

</llo_original>
